<compile_context>
chip_gen: v5e
topology: v5e:2x2
jax: 0.10.0
libtpu: 0.0.40
codegen_flags: <defaults>
</compile_context>

<pallas_src>
import jax
import jax.numpy as jnp
from jax.experimental import pallas as pl
from jax.experimental.pallas import tpu as pltpu


def _transpose_kernel(x_ref, o_ref):
    # x_ref: (T, S, D) block in VMEM; o_ref: (T, D, S) block.
    # Minor-dim swap maps to the XLU transpose path (off the VALU), batched
    # over the leading T slices.
    o_ref[...] = jnp.swapaxes(x_ref[...], -1, -2)


def _choose_tiling(bh):
    """Return (T, steps): T slices of (S, D) per grid step, `steps` grid steps.

    Target ~4 steps: 2+ per TensorCore on v7x for intra-core pipelining, and
    enough steps on 1-TC chips (v5e/v6e) to hide head/tail DMA, while keeping
    the ~0.35 us/step overhead small vs. the HBM traffic.
    """
    if bh <= 1:
        return max(bh, 1), 1
    target = 4
    divisors = [g for g in range(2, 7) if bh % g == 0]
    if divisors:
        steps = min(divisors, key=lambda g: (abs(g - target), g))
        return bh // steps, steps
    # No small divisor (e.g. BH = 7, 11, 13): keep blocks fat and let the last
    # grid step be partial instead of degrading to grid=BH with T=1.
    T = pl.cdiv(bh, target)
    steps = pl.cdiv(bh, T)
    return T, steps


def transpose_last_two(x):
    """x: [B, H, S, D] -> [B, H, D, S] via a Pallas TPU kernel."""
    B, H, S, D = x.shape
    BH = B * H
    x2 = x.reshape(BH, S, D)

    T, steps = _choose_tiling(BH)

    itemsize = jnp.dtype(x.dtype).itemsize
    cost = pl.CostEstimate(
        flops=0,
        transcendentals=0,
        bytes_accessed=2 * BH * S * D * itemsize,  # read + write once
    )

    out = pl.pallas_call(
        _transpose_kernel,
        out_shape=jax.ShapeDtypeStruct((BH, D, S), x.dtype),
        grid_spec=pltpu.PrefetchScalarGridSpec(
            num_scalar_prefetch=0,
            grid=(steps,),
            # Last two dims of each block equal the full array dims, so the
            # (8,128) tiling constraint is satisfied for any S/D; only the
            # leading (slice) dim is tiled, and it may have a partial last
            # block (writes past BH are masked).
            in_specs=[pl.BlockSpec((T, S, D), lambda i: (i, 0, 0))],
            out_specs=pl.BlockSpec((T, D, S), lambda i: (i, 0, 0)),
        ),
        compiler_params=pltpu.CompilerParams(
            dimension_semantics=("parallel",)
        ),
        cost_estimate=cost,
    )(x2)

    return out.reshape(B, H, D, S)


if __name__ == "__main__":
    key = jax.random.PRNGKey(0)

    # Same shape family as the reference module: [1, 12, 384, 64]
    x79 = jax.random.normal(key, (1, 12, 384, 64), dtype=jnp.float32)
    y = transpose_last_two(x79)
    jax.block_until_ready(y)

    ref = jnp.swapaxes(x79, -1, -2)
    assert y.shape == (1, 12, 64, 384), y.shape
    assert jnp.array_equal(y, ref), "mismatch vs reference transpose"

    # Exercise the hardened path: BH with no small divisor -> partial last block.
    x_odd = jax.random.normal(jax.random.PRNGKey(1), (1, 7, 128, 64), dtype=jnp.float32)
    y_odd = transpose_last_two(x_odd)
    jax.block_until_ready(y_odd)
    assert y_odd.shape == (1, 7, 64, 128), y_odd.shape
    assert jnp.array_equal(y_odd, jnp.swapaxes(x_odd, -1, -2)), "odd-BH mismatch"

    print("KERNEL_OK")
</pallas_src>

<mosaic_0001>
module attributes {stable_mosaic.version = 11 : i64} {
  func.func @_transpose_kernel(%arg0: i32, %arg1: memref<3x384x64xf32, #tpu.memory_space<vmem>>, %arg2: memref<3x64x384xf32, #tpu.memory_space<vmem>>) attributes {dimension_semantics = [#tpu.dimension_semantics<parallel>], iteration_bounds = array<i64: 4>, scalar_prefetch = 0 : i64, scratch_operands = 0 : i64, tpu.core_type = #tpu.core_type<tc>, window_params = [{transform_indices = @transform_0, window_bounds = array<i64: 3, 384, 64>}, {transform_indices = @transform_1, window_bounds = array<i64: 3, 64, 384>}]} {
    %c0 = arith.constant 0 : index
    %c0_0 = arith.constant 0 : index
    %c0_1 = arith.constant 0 : index
    %0 = vector.load %arg1[%c0, %c0_0, %c0_1] : memref<3x384x64xf32, #tpu.memory_space<vmem>>, vector<3x384x64xf32>
    %1 = tpu.transpose %0, [0, 2, 1] : vector<3x384x64xf32> -> vector<3x64x384xf32>
    %c0_2 = arith.constant 0 : index
    %c0_3 = arith.constant 0 : index
    %c0_4 = arith.constant 0 : index
    %2 = vector.load %arg2[%c0_2, %c0_3, %c0_4] : memref<3x64x384xf32, #tpu.memory_space<vmem>>, vector<3x64x384xf32>
    tpu.vector_store %arg2[%c0_2, %c0_3, %c0_4], %1 {strides = array<i32>} : memref<3x64x384xf32, #tpu.memory_space<vmem>>, vector<3x64x384xf32>,
    return
  }
  func.func @transform_0(%arg0: i32) -> (i32, i32, i32) {
    %c0_i32 = arith.constant 0 : i32
    %c0_i32_0 = arith.constant 0 : i32
    %c0_i32_1 = arith.constant 0 : i32
    return %arg0, %c0_i32, %c0_i32_0 : i32, i32, i32
  }
  func.func @transform_1(%arg0: i32) -> (i32, i32, i32) {
    %c0_i32 = arith.constant 0 : i32
    %c0_i32_0 = arith.constant 0 : i32
    %c0_i32_1 = arith.constant 0 : i32
    return %arg0, %c0_i32, %c0_i32_0 : i32, i32, i32
  }
}

</mosaic_0001>

<llo_original>
// kernel: tpu_custom_call.1
$region0: #{tpu_custom_call.1}
  #allocation0 [shape = 'u32[]', space=smem, size = 0x4, offset = 0x4, fixed_abs, tag = 'smem constant byte address 0x4 - core index']
  #allocation1 [shape = 'u32[72,128]{1,0:T(1,128)}', space=vmem, size = 0x9000, scoped, tag = 'internal scratch']
  %s0 = inlined_call_operand.vmem [shape: f32[12,384,64], index: 0, kind: input, shape index: {}]
  %s1 = inlined_call_operand.hbm [shape: f32[12,64,384], index: 1, kind: output, shape index: {}]
  %s2 = sld [smem:[#allocation0]]
  $region37: #{tpu_custom_call.1} parent=0
    _
  %s4 = ssub.s32 1, %s2
  %s5 = scalar_select 0, %s4, %s2
  $region1: #{tpu_custom_call.1} parent=0
    #allocation2 [shape = 'u8[589824]{0}', space=vmem, size = 0x90000, scoped, tag = 'output window, operand 0']
    #allocation3 [shape = 's32[2]{0}', space=sflag, size = 0x8, scoped, tag = 'scoped memory for tpu_custom_call.1']
    %6 = vsyncpa [#allocation3], 0
    %s7 = scalar_lea.sflag [#allocation3], 1
    %8 = vsyncpa %s7, 0
    loop: start=0, step=1, limit=6
    $region2: #{tpu_custom_call.1} parent=1 // loop_pre_header
      _
    $region3: #{tpu_custom_call.1} parent=1 // loop_header
      %s10 = sphi 0, %s14
      %p11 = scmp.ge.s32.totalorder %s10, 6
      %s20 = sphi 0, %s22
      %s23 = sphi 0, %s20
      %s24 = sphi 0, %s23
      %s40 = sphi 0, %s24
      %s46 = sphi 0, %s48
      %s49 = sphi 0, %s46
      %s50 = sphi 0, %s49
      %s66 = sphi 0, %s50
    $region4: #{tpu_custom_call.1} parent=1 // loop_header_branch
      %13 = sbr.rel (%p11) target = $region8
    $region5: #{tpu_custom_call.1} parent=1 // loop_body
      %s15 = ssub.s32 %s10, 1
      %s16 = ssub.s32 %s10, 2
      %s17 = sadd.s32 %s10, 1
      %s18 = ssub.s32 %s10, %s17
      %p19 = scmp.eq.s32.totalorder %s18, 0
      %s21 = sadd.s32 %s20, 1
      %s22 = scalar_select %p19, %s20, %s21
      %p25 = pneg %p19
      %p26 = scmp.eq.s32.totalorder %s10, 3
      %p27 = por %p25, %p26
      %p28 = scmp.ne.s32.totalorder %s20, %s23
      %p29 = scmp.eq.s32.totalorder %s10, 0
      %p30 = por %p28, %p29
      %p31 = scmp.ne.s32.totalorder %s20, %s23
      %p32 = scmp.eq.s32.totalorder %s15, 3
      %p33 = por %p31, %p32
      %p34 = scmp.ne.s32.totalorder %s23, %s24
      %p35 = scmp.eq.s32.totalorder %s15, 0
      %p36 = por %p34, %p35
      %p37 = scmp.ne.s32.totalorder %s23, %s24
      %p38 = scmp.eq.s32.totalorder %s16, 3
      %p39 = por %p37, %p38
      %p41 = scmp.ne.s32.totalorder %s24, %s40
      %p42 = scmp.eq.s32.totalorder %s16, 0
      %p43 = por %p41, %p42
      %s44 = ssub.s32 %s10, %s17
      %p45 = scmp.eq.s32.totalorder %s44, 0
      %s47 = sadd.s32 %s46, 1
      %s48 = scalar_select %p45, %s46, %s47
      %p51 = pneg %p45
      %p52 = scmp.eq.s32.totalorder %s10, 3
      %p53 = por %p51, %p52
      %p54 = scmp.ne.s32.totalorder %s46, %s49
      %p55 = scmp.eq.s32.totalorder %s10, 0
      %p56 = por %p54, %p55
      %p57 = scmp.ne.s32.totalorder %s46, %s49
      %p58 = scmp.eq.s32.totalorder %s15, 3
      %p59 = por %p57, %p58
      %p60 = scmp.ne.s32.totalorder %s49, %s50
      %p61 = scmp.eq.s32.totalorder %s15, 0
      %p62 = por %p60, %p61
      %p63 = scmp.ne.s32.totalorder %s49, %s50
      %p64 = scmp.eq.s32.totalorder %s16, 3
      %p65 = por %p63, %p64
      %p67 = scmp.ne.s32.totalorder %s50, %s66
      %p68 = scmp.eq.s32.totalorder %s16, 0
      %p69 = por %p67, %p68
      %p70 = scmp.le.s32.totalorder 1, %s10
      %p71 = scmp.lt.s32.totalorder %s10, 5
      %p72 = pnand %p70, %p71
      %p73 = pneg %p72
      // Predicated region
      $region9: #{tpu_custom_call.1} parent=5 // pred_check
        _
      $region10: #{tpu_custom_call.1} parent=5 // pred_check_branch
        %75 = sbr.rel (%p72) target = $region12
      $region11: #{tpu_custom_call.1} parent=5 // pred_region
        %s76 = ssub.s32 %s10, 1
      $region12: #{tpu_custom_call.1} parent=5 // pred_fallthru
        _
      %p77 = scmp.lt.s32.totalorder %s10, 4
      // Predicated region
      $region13: #{tpu_custom_call.1} parent=5 // pred_check
        %p78 = pneg %p77
      $region14: #{tpu_custom_call.1} parent=5 // pred_check_branch
        %80 = sbr.rel (%p78) target = $region16
      $region15: #{tpu_custom_call.1} parent=5 // pred_region
        // Predicated region
        $region17: #{tpu_custom_call.1} parent=15 // pred_check
          %p81 = pneg %p30
        $region18: #{tpu_custom_call.1} parent=15 // pred_check_branch
          %83 = sbr.rel (%p81) target = $region20
        $region19: #{tpu_custom_call.1} parent=15 // pred_region
          %s84 = smul.u32 3, %s10
          %p85 = scmp.lt.s32.totalorder %s84, 11
          %s86 = scalar_select %p85, %s84, 11
          %s87 = smul.addr %s86, 48
          %s88 = smul.addr %s87, 8
          %s89 = scalar_lea.vmem %s0, %s88
          %s90 = smul.u32 3, %s10
        $region20: #{tpu_custom_call.1} parent=15 // pred_fallthru
          _
      $region16: #{tpu_custom_call.1} parent=5 // pred_fallthru
        _
      %p91 = scmp.le.s32.totalorder 1, %s10
      %p92 = scmp.lt.s32.totalorder %s10, 5
      %p93 = pnand %p91, %p92
      %p94 = pneg %p93
      // Predicated region
      $region21: #{tpu_custom_call.1} parent=5 // pred_check
        _
      $region22: #{tpu_custom_call.1} parent=5 // pred_check_branch
        %96 = sbr.rel (%p93) target = $region24
      $region23: #{tpu_custom_call.1} parent=5 // pred_region
        %s97 = ssub.s32 %s10, 1
        %s98 = smul.u32 3, %s15
        %p99 = scmp.lt.s32.totalorder %s98, 11
        %s100 = scalar_select %p99, %s98, 11
        %s101 = smul.addr %s100, 48
        %s102 = smul.addr %s101, 8
        %s103 = scalar_lea.vmem %s0, %s102
        %p104 = pneg %p36
        %p105 = pneg %p33
        %p106 = pneg %p62
        %p107 = pneg %p59
        %s108 = sand.u32 %s49, 1
        %s109 = scalar_lea.sflag [#allocation3], %s108
        %s110 = sand.u32 %s49, 1
        %s111 = smul.addr %s110, 576
        %s112 = scalar_lea.vmem [#allocation2], %s111
        %s113 = smul.u32 3, %s15
        %p114 = scmp.lt.s32.totalorder %s113, 11
        %s115 = scalar_select %p114, %s113, 11
        %s116 = smul.addr %s115, 48
        %s117 = smul.addr %s116, 8
        %s118 = scalar_lea.vmem %s0, %s117
        %s119 = smul.u32 3, %s15
        %s120 = smul.u32 3, %s15
        %v121 = vld [vmem:[%s118] sm:$0xff]
        %v122 = vld [vmem:[%s118 + $0x8] sm:$0xff]
        %v123 = vld [vmem:[%s118 + $0x10] sm:$0xff]
        %v124 = vld [vmem:[%s118 + $0x18] sm:$0xff]
        %v125 = vld [vmem:[%s118 + $0x20] sm:$0xff]
        %v126 = vld [vmem:[%s118 + $0x28] sm:$0xff]
        %v127 = vld [vmem:[%s118 + $0x30] sm:$0xff]
        %v128 = vld [vmem:[%s118 + $0x38] sm:$0xff]
        %v129 = vld [vmem:[%s118 + $0x40] sm:$0xff]
        %v130 = vld [vmem:[%s118 + $0x48] sm:$0xff]
        %v131 = vld [vmem:[%s118 + $0x50] sm:$0xff]
        %v132 = vld [vmem:[%s118 + $0x58] sm:$0xff]
        %v133 = vld [vmem:[%s118 + $0x60] sm:$0xff]
        %v134 = vld [vmem:[%s118 + $0x68] sm:$0xff]
        %v135 = vld [vmem:[%s118 + $0x70] sm:$0xff]
        %v136 = vld [vmem:[%s118 + $0x78] sm:$0xff]
        %v137 = vld [vmem:[%s118 + $0x80] sm:$0xff]
        %v138 = vld [vmem:[%s118 + $0x88] sm:$0xff]
        %v139 = vld [vmem:[%s118 + $0x90] sm:$0xff]
        %v140 = vld [vmem:[%s118 + $0x98] sm:$0xff]
        %v141 = vld [vmem:[%s118 + $0xa0] sm:$0xff]
        %v142 = vld [vmem:[%s118 + $0xa8] sm:$0xff]
        %v143 = vld [vmem:[%s118 + $0xb0] sm:$0xff]
        %v144 = vld [vmem:[%s118 + $0xb8] sm:$0xff]
        %v145 = vld [vmem:[%s118 + $0xc0] sm:$0xff]
        %v146 = vld [vmem:[%s118 + $0xc8] sm:$0xff]
        %v147 = vld [vmem:[%s118 + $0xd0] sm:$0xff]
        %v148 = vld [vmem:[%s118 + $0xd8] sm:$0xff]
        %v149 = vld [vmem:[%s118 + $0xe0] sm:$0xff]
        %v150 = vld [vmem:[%s118 + $0xe8] sm:$0xff]
        %v151 = vld [vmem:[%s118 + $0xf0] sm:$0xff]
        %v152 = vld [vmem:[%s118 + $0xf8] sm:$0xff]
        %v153 = vld [vmem:[%s118 + $0x100] sm:$0xff]
        %v154 = vld [vmem:[%s118 + $0x108] sm:$0xff]
        %v155 = vld [vmem:[%s118 + $0x110] sm:$0xff]
        %v156 = vld [vmem:[%s118 + $0x118] sm:$0xff]
        %v157 = vld [vmem:[%s118 + $0x120] sm:$0xff]
        %v158 = vld [vmem:[%s118 + $0x128] sm:$0xff]
        %v159 = vld [vmem:[%s118 + $0x130] sm:$0xff]
        %v160 = vld [vmem:[%s118 + $0x138] sm:$0xff]
        %v161 = vld [vmem:[%s118 + $0x140] sm:$0xff]
        %v162 = vld [vmem:[%s118 + $0x148] sm:$0xff]
        %v163 = vld [vmem:[%s118 + $0x150] sm:$0xff]
        %v164 = vld [vmem:[%s118 + $0x158] sm:$0xff]
        %v165 = vld [vmem:[%s118 + $0x160] sm:$0xff]
        %v166 = vld [vmem:[%s118 + $0x168] sm:$0xff]
        %v167 = vld [vmem:[%s118 + $0x170] sm:$0xff]
        %v168 = vld [vmem:[%s118 + $0x178] sm:$0xff]
        %v169 = vld [vmem:[%s118 + $0x180] sm:$0xff]
        %v170 = vld [vmem:[%s118 + $0x188] sm:$0xff]
        %v171 = vld [vmem:[%s118 + $0x190] sm:$0xff]
        %v172 = vld [vmem:[%s118 + $0x198] sm:$0xff]
        %v173 = vld [vmem:[%s118 + $0x1a0] sm:$0xff]
        %v174 = vld [vmem:[%s118 + $0x1a8] sm:$0xff]
        %v175 = vld [vmem:[%s118 + $0x1b0] sm:$0xff]
        %v176 = vld [vmem:[%s118 + $0x1b8] sm:$0xff]
        %v177 = vld [vmem:[%s118 + $0x1c0] sm:$0xff]
        %v178 = vld [vmem:[%s118 + $0x1c8] sm:$0xff]
        %v179 = vld [vmem:[%s118 + $0x1d0] sm:$0xff]
        %v180 = vld [vmem:[%s118 + $0x1d8] sm:$0xff]
        %v181 = vld [vmem:[%s118 + $0x1e0] sm:$0xff]
        %v182 = vld [vmem:[%s118 + $0x1e8] sm:$0xff]
        %v183 = vld [vmem:[%s118 + $0x1f0] sm:$0xff]
        %v184 = vld [vmem:[%s118 + $0x1f8] sm:$0xff]
        %v185 = vld [vmem:[%s118 + $0x200] sm:$0xff]
        %v186 = vld [vmem:[%s118 + $0x208] sm:$0xff]
        %v187 = vld [vmem:[%s118 + $0x210] sm:$0xff]
        %v188 = vld [vmem:[%s118 + $0x218] sm:$0xff]
        %v189 = vld [vmem:[%s118 + $0x220] sm:$0xff]
        %v190 = vld [vmem:[%s118 + $0x228] sm:$0xff]
        %v191 = vld [vmem:[%s118 + $0x230] sm:$0xff]
        %v192 = vld [vmem:[%s118 + $0x238] sm:$0xff]
        %v193 = vld [vmem:[%s118 + $0x240] sm:$0xff]
        %v194 = vld [vmem:[%s118 + $0x248] sm:$0xff]
        %v195 = vld [vmem:[%s118 + $0x250] sm:$0xff]
        %v196 = vld [vmem:[%s118 + $0x258] sm:$0xff]
        %v197 = vld [vmem:[%s118 + $0x260] sm:$0xff]
        %v198 = vld [vmem:[%s118 + $0x268] sm:$0xff]
        %v199 = vld [vmem:[%s118 + $0x270] sm:$0xff]
        %v200 = vld [vmem:[%s118 + $0x278] sm:$0xff]
        %v201 = vld [vmem:[%s118 + $0x280] sm:$0xff]
        %v202 = vld [vmem:[%s118 + $0x288] sm:$0xff]
        %v203 = vld [vmem:[%s118 + $0x290] sm:$0xff]
        %v204 = vld [vmem:[%s118 + $0x298] sm:$0xff]
        %v205 = vld [vmem:[%s118 + $0x2a0] sm:$0xff]
        %v206 = vld [vmem:[%s118 + $0x2a8] sm:$0xff]
        %v207 = vld [vmem:[%s118 + $0x2b0] sm:$0xff]
        %v208 = vld [vmem:[%s118 + $0x2b8] sm:$0xff]
        %v209 = vld [vmem:[%s118 + $0x2c0] sm:$0xff]
        %v210 = vld [vmem:[%s118 + $0x2c8] sm:$0xff]
        %v211 = vld [vmem:[%s118 + $0x2d0] sm:$0xff]
        %v212 = vld [vmem:[%s118 + $0x2d8] sm:$0xff]
        %v213 = vld [vmem:[%s118 + $0x2e0] sm:$0xff]
        %v214 = vld [vmem:[%s118 + $0x2e8] sm:$0xff]
        %v215 = vld [vmem:[%s118 + $0x2f0] sm:$0xff]
        %v216 = vld [vmem:[%s118 + $0x2f8] sm:$0xff]
        %v217 = vld [vmem:[%s118 + $0x300] sm:$0xff]
        %v218 = vld [vmem:[%s118 + $0x308] sm:$0xff]
        %v219 = vld [vmem:[%s118 + $0x310] sm:$0xff]
        %v220 = vld [vmem:[%s118 + $0x318] sm:$0xff]
        %v221 = vld [vmem:[%s118 + $0x320] sm:$0xff]
        %v222 = vld [vmem:[%s118 + $0x328] sm:$0xff]
        %v223 = vld [vmem:[%s118 + $0x330] sm:$0xff]
        %v224 = vld [vmem:[%s118 + $0x338] sm:$0xff]
        %v225 = vld [vmem:[%s118 + $0x340] sm:$0xff]
        %v226 = vld [vmem:[%s118 + $0x348] sm:$0xff]
        %v227 = vld [vmem:[%s118 + $0x350] sm:$0xff]
        %v228 = vld [vmem:[%s118 + $0x358] sm:$0xff]
        %v229 = vld [vmem:[%s118 + $0x360] sm:$0xff]
        %v230 = vld [vmem:[%s118 + $0x368] sm:$0xff]
        %v231 = vld [vmem:[%s118 + $0x370] sm:$0xff]
        %v232 = vld [vmem:[%s118 + $0x378] sm:$0xff]
        %v233 = vld [vmem:[%s118 + $0x380] sm:$0xff]
        %v234 = vld [vmem:[%s118 + $0x388] sm:$0xff]
        %v235 = vld [vmem:[%s118 + $0x390] sm:$0xff]
        %v236 = vld [vmem:[%s118 + $0x398] sm:$0xff]
        %v237 = vld [vmem:[%s118 + $0x3a0] sm:$0xff]
        %v238 = vld [vmem:[%s118 + $0x3a8] sm:$0xff]
        %v239 = vld [vmem:[%s118 + $0x3b0] sm:$0xff]
        %v240 = vld [vmem:[%s118 + $0x3b8] sm:$0xff]
        %v241 = vld [vmem:[%s118 + $0x3c0] sm:$0xff]
        %v242 = vld [vmem:[%s118 + $0x3c8] sm:$0xff]
        %v243 = vld [vmem:[%s118 + $0x3d0] sm:$0xff]
        %v244 = vld [vmem:[%s118 + $0x3d8] sm:$0xff]
        %v245 = vld [vmem:[%s118 + $0x3e0] sm:$0xff]
        %v246 = vld [vmem:[%s118 + $0x3e8] sm:$0xff]
        %v247 = vld [vmem:[%s118 + $0x3f0] sm:$0xff]
        %v248 = vld [vmem:[%s118 + $0x3f8] sm:$0xff]
        %v249 = vld [vmem:[%s118 + $0x400] sm:$0xff]
        %v250 = vld [vmem:[%s118 + $0x408] sm:$0xff]
        %v251 = vld [vmem:[%s118 + $0x410] sm:$0xff]
        %v252 = vld [vmem:[%s118 + $0x418] sm:$0xff]
        %v253 = vld [vmem:[%s118 + $0x420] sm:$0xff]
        %v254 = vld [vmem:[%s118 + $0x428] sm:$0xff]
        %v255 = vld [vmem:[%s118 + $0x430] sm:$0xff]
        %v256 = vld [vmem:[%s118 + $0x438] sm:$0xff]
        %v257 = vld [vmem:[%s118 + $0x440] sm:$0xff]
        %v258 = vld [vmem:[%s118 + $0x448] sm:$0xff]
        %v259 = vld [vmem:[%s118 + $0x450] sm:$0xff]
        %v260 = vld [vmem:[%s118 + $0x458] sm:$0xff]
        %v261 = vld [vmem:[%s118 + $0x460] sm:$0xff]
        %v262 = vld [vmem:[%s118 + $0x468] sm:$0xff]
        %v263 = vld [vmem:[%s118 + $0x470] sm:$0xff]
        %v264 = vld [vmem:[%s118 + $0x478] sm:$0xff]
        %265 = vxpose.xlu0.b32.start [1/16] %v121, 128
        %266 = vxpose.xlu0.b32.cont [2/16] %v122, 128
        %267 = vxpose.xlu0.b32.cont [3/16] %v123, 128
        %268 = vxpose.xlu0.b32.cont [4/16] %v124, 128
        %269 = vxpose.xlu0.b32.cont [5/16] %v125, 128
        %270 = vxpose.xlu0.b32.cont [6/16] %v126, 128
        %271 = vxpose.xlu0.b32.cont [7/16] %v127, 128
        %272 = vxpose.xlu0.b32.cont [8/16] %v128, 128
        %273 = vxpose.xlu0.b32.cont [9/16] %v129, 128
        %274 = vxpose.xlu0.b32.cont [10/16] %v130, 128
        %275 = vxpose.xlu0.b32.cont [11/16] %v131, 128
        %276 = vxpose.xlu0.b32.cont [12/16] %v132, 128
        %277 = vxpose.xlu0.b32.cont [13/16] %v133, 128
        %278 = vxpose.xlu0.b32.cont [14/16] %v134, 128
        %279 = vxpose.xlu0.b32.cont [15/16] %v135, 128
        %280 = vxpose.xlu0.b32.end [16/16] %v136, 128
        %v281 = vpop.trf.xlu0
        %v282 = vpop.trf.xlu0
        %v283 = vpop.trf.xlu0
        %v284 = vpop.trf.xlu0
        %v285 = vpop.trf.xlu0
        %v286 = vpop.trf.xlu0
        %v287 = vpop.trf.xlu0
        %v288 = vpop.trf.xlu0
        %v289 = vpop.trf.xlu0
        %v290 = vpop.trf.xlu0
        %v291 = vpop.trf.xlu0
        %v292 = vpop.trf.xlu0
        %v293 = vpop.trf.xlu0
        %v294 = vpop.trf.xlu0
        %v295 = vpop.trf.xlu0
        %v296 = vpop.trf.xlu0
        %297 = vxpose.xlu0.b32.start [1/16] %v137, 128
        %298 = vxpose.xlu0.b32.cont [2/16] %v138, 128
        %299 = vxpose.xlu0.b32.cont [3/16] %v139, 128
        %300 = vxpose.xlu0.b32.cont [4/16] %v140, 128
        %301 = vxpose.xlu0.b32.cont [5/16] %v141, 128
        %302 = vxpose.xlu0.b32.cont [6/16] %v142, 128
        %303 = vxpose.xlu0.b32.cont [7/16] %v143, 128
        %304 = vxpose.xlu0.b32.cont [8/16] %v144, 128
        %305 = vxpose.xlu0.b32.cont [9/16] %v145, 128
        %306 = vxpose.xlu0.b32.cont [10/16] %v146, 128
        %307 = vxpose.xlu0.b32.cont [11/16] %v147, 128
        %308 = vxpose.xlu0.b32.cont [12/16] %v148, 128
        %309 = vxpose.xlu0.b32.cont [13/16] %v149, 128
        %310 = vxpose.xlu0.b32.cont [14/16] %v150, 128
        %311 = vxpose.xlu0.b32.cont [15/16] %v151, 128
        %312 = vxpose.xlu0.b32.end [16/16] %v152, 128
        %v313 = vpop.trf.xlu0
        %v314 = vpop.trf.xlu0
        %v315 = vpop.trf.xlu0
        %v316 = vpop.trf.xlu0
        %v317 = vpop.trf.xlu0
        %v318 = vpop.trf.xlu0
        %v319 = vpop.trf.xlu0
        %v320 = vpop.trf.xlu0
        %v321 = vpop.trf.xlu0
        %v322 = vpop.trf.xlu0
        %v323 = vpop.trf.xlu0
        %v324 = vpop.trf.xlu0
        %v325 = vpop.trf.xlu0
        %v326 = vpop.trf.xlu0
        %v327 = vpop.trf.xlu0
        %v328 = vpop.trf.xlu0
        %329 = vxpose.xlu0.b32.start [1/16] %v153, 128
        %330 = vxpose.xlu0.b32.cont [2/16] %v154, 128
        %331 = vxpose.xlu0.b32.cont [3/16] %v155, 128
        %332 = vxpose.xlu0.b32.cont [4/16] %v156, 128
        %333 = vxpose.xlu0.b32.cont [5/16] %v157, 128
        %334 = vxpose.xlu0.b32.cont [6/16] %v158, 128
        %335 = vxpose.xlu0.b32.cont [7/16] %v159, 128
        %336 = vxpose.xlu0.b32.cont [8/16] %v160, 128
        %337 = vxpose.xlu0.b32.cont [9/16] %v161, 128
        %338 = vxpose.xlu0.b32.cont [10/16] %v162, 128
        %339 = vxpose.xlu0.b32.cont [11/16] %v163, 128
        %340 = vxpose.xlu0.b32.cont [12/16] %v164, 128
        %341 = vxpose.xlu0.b32.cont [13/16] %v165, 128
        %342 = vxpose.xlu0.b32.cont [14/16] %v166, 128
        %343 = vxpose.xlu0.b32.cont [15/16] %v167, 128
        %344 = vxpose.xlu0.b32.end [16/16] %v168, 128
        %v345 = vpop.trf.xlu0
        %v346 = vpop.trf.xlu0
        %v347 = vpop.trf.xlu0
        %v348 = vpop.trf.xlu0
        %v349 = vpop.trf.xlu0
        %v350 = vpop.trf.xlu0
        %v351 = vpop.trf.xlu0
        %v352 = vpop.trf.xlu0
        %v353 = vpop.trf.xlu0
        %v354 = vpop.trf.xlu0
        %v355 = vpop.trf.xlu0
        %v356 = vpop.trf.xlu0
        %v357 = vpop.trf.xlu0
        %v358 = vpop.trf.xlu0
        %v359 = vpop.trf.xlu0
        %v360 = vpop.trf.xlu0
        %361 = vxpose.xlu0.b32.start [1/16] %v169, 128
        %362 = vxpose.xlu0.b32.cont [2/16] %v170, 128
        %363 = vxpose.xlu0.b32.cont [3/16] %v171, 128
        %364 = vxpose.xlu0.b32.cont [4/16] %v172, 128
        %365 = vxpose.xlu0.b32.cont [5/16] %v173, 128
        %366 = vxpose.xlu0.b32.cont [6/16] %v174, 128
        %367 = vxpose.xlu0.b32.cont [7/16] %v175, 128
        %368 = vxpose.xlu0.b32.cont [8/16] %v176, 128
        %369 = vxpose.xlu0.b32.cont [9/16] %v177, 128
        %370 = vxpose.xlu0.b32.cont [10/16] %v178, 128
        %371 = vxpose.xlu0.b32.cont [11/16] %v179, 128
        %372 = vxpose.xlu0.b32.cont [12/16] %v180, 128
        %373 = vxpose.xlu0.b32.cont [13/16] %v181, 128
        %374 = vxpose.xlu0.b32.cont [14/16] %v182, 128
        %375 = vxpose.xlu0.b32.cont [15/16] %v183, 128
        %376 = vxpose.xlu0.b32.end [16/16] %v184, 128
        %v377 = vpop.trf.xlu0
        %v378 = vpop.trf.xlu0
        %v379 = vpop.trf.xlu0
        %v380 = vpop.trf.xlu0
        %v381 = vpop.trf.xlu0
        %v382 = vpop.trf.xlu0
        %v383 = vpop.trf.xlu0
        %v384 = vpop.trf.xlu0
        %v385 = vpop.trf.xlu0
        %v386 = vpop.trf.xlu0
        %v387 = vpop.trf.xlu0
        %v388 = vpop.trf.xlu0
        %v389 = vpop.trf.xlu0
        %v390 = vpop.trf.xlu0
        %v391 = vpop.trf.xlu0
        %v392 = vpop.trf.xlu0
        %393 = vxpose.xlu0.b32.start [1/16] %v185, 128
        %394 = vxpose.xlu0.b32.cont [2/16] %v186, 128
        %395 = vxpose.xlu0.b32.cont [3/16] %v187, 128
        %396 = vxpose.xlu0.b32.cont [4/16] %v188, 128
        %397 = vxpose.xlu0.b32.cont [5/16] %v189, 128
        %398 = vxpose.xlu0.b32.cont [6/16] %v190, 128
        %399 = vxpose.xlu0.b32.cont [7/16] %v191, 128
        %400 = vxpose.xlu0.b32.cont [8/16] %v192, 128
        %401 = vxpose.xlu0.b32.cont [9/16] %v193, 128
        %402 = vxpose.xlu0.b32.cont [10/16] %v194, 128
        %403 = vxpose.xlu0.b32.cont [11/16] %v195, 128
        %404 = vxpose.xlu0.b32.cont [12/16] %v196, 128
        %405 = vxpose.xlu0.b32.cont [13/16] %v197, 128
        %406 = vxpose.xlu0.b32.cont [14/16] %v198, 128
        %407 = vxpose.xlu0.b32.cont [15/16] %v199, 128
        %408 = vxpose.xlu0.b32.end [16/16] %v200, 128
        %v409 = vpop.trf.xlu0
        %v410 = vpop.trf.xlu0
        %v411 = vpop.trf.xlu0
        %v412 = vpop.trf.xlu0
        %v413 = vpop.trf.xlu0
        %v414 = vpop.trf.xlu0
        %v415 = vpop.trf.xlu0
        %v416 = vpop.trf.xlu0
        %v417 = vpop.trf.xlu0
        %v418 = vpop.trf.xlu0
        %v419 = vpop.trf.xlu0
        %v420 = vpop.trf.xlu0
        %v421 = vpop.trf.xlu0
        %v422 = vpop.trf.xlu0
        %v423 = vpop.trf.xlu0
        %v424 = vpop.trf.xlu0
        %425 = vxpose.xlu0.b32.start [1/16] %v201, 128
        %426 = vxpose.xlu0.b32.cont [2/16] %v202, 128
        %427 = vxpose.xlu0.b32.cont [3/16] %v203, 128
        %428 = vxpose.xlu0.b32.cont [4/16] %v204, 128
        %429 = vxpose.xlu0.b32.cont [5/16] %v205, 128
        %430 = vxpose.xlu0.b32.cont [6/16] %v206, 128
        %431 = vxpose.xlu0.b32.cont [7/16] %v207, 128
        %432 = vxpose.xlu0.b32.cont [8/16] %v208, 128
        %433 = vxpose.xlu0.b32.cont [9/16] %v209, 128
        %434 = vxpose.xlu0.b32.cont [10/16] %v210, 128
        %435 = vxpose.xlu0.b32.cont [11/16] %v211, 128
        %436 = vxpose.xlu0.b32.cont [12/16] %v212, 128
        %437 = vxpose.xlu0.b32.cont [13/16] %v213, 128
        %438 = vxpose.xlu0.b32.cont [14/16] %v214, 128
        %439 = vxpose.xlu0.b32.cont [15/16] %v215, 128
        %440 = vxpose.xlu0.b32.end [16/16] %v216, 128
        %v441 = vpop.trf.xlu0
        %v442 = vpop.trf.xlu0
        %v443 = vpop.trf.xlu0
        %v444 = vpop.trf.xlu0
        %v445 = vpop.trf.xlu0
        %v446 = vpop.trf.xlu0
        %v447 = vpop.trf.xlu0
        %v448 = vpop.trf.xlu0
        %v449 = vpop.trf.xlu0
        %v450 = vpop.trf.xlu0
        %v451 = vpop.trf.xlu0
        %v452 = vpop.trf.xlu0
        %v453 = vpop.trf.xlu0
        %v454 = vpop.trf.xlu0
        %v455 = vpop.trf.xlu0
        %v456 = vpop.trf.xlu0
        %457 = vxpose.xlu0.b32.start [1/16] %v217, 128
        %458 = vxpose.xlu0.b32.cont [2/16] %v218, 128
        %459 = vxpose.xlu0.b32.cont [3/16] %v219, 128
        %460 = vxpose.xlu0.b32.cont [4/16] %v220, 128
        %461 = vxpose.xlu0.b32.cont [5/16] %v221, 128
        %462 = vxpose.xlu0.b32.cont [6/16] %v222, 128
        %463 = vxpose.xlu0.b32.cont [7/16] %v223, 128
        %464 = vxpose.xlu0.b32.cont [8/16] %v224, 128
        %465 = vxpose.xlu0.b32.cont [9/16] %v225, 128
        %466 = vxpose.xlu0.b32.cont [10/16] %v226, 128
        %467 = vxpose.xlu0.b32.cont [11/16] %v227, 128
        %468 = vxpose.xlu0.b32.cont [12/16] %v228, 128
        %469 = vxpose.xlu0.b32.cont [13/16] %v229, 128
        %470 = vxpose.xlu0.b32.cont [14/16] %v230, 128
        %471 = vxpose.xlu0.b32.cont [15/16] %v231, 128
        %472 = vxpose.xlu0.b32.end [16/16] %v232, 128
        %v473 = vpop.trf.xlu0
        %v474 = vpop.trf.xlu0
        %v475 = vpop.trf.xlu0
        %v476 = vpop.trf.xlu0
        %v477 = vpop.trf.xlu0
        %v478 = vpop.trf.xlu0
        %v479 = vpop.trf.xlu0
        %v480 = vpop.trf.xlu0
        %v481 = vpop.trf.xlu0
        %v482 = vpop.trf.xlu0
        %v483 = vpop.trf.xlu0
        %v484 = vpop.trf.xlu0
        %v485 = vpop.trf.xlu0
        %v486 = vpop.trf.xlu0
        %v487 = vpop.trf.xlu0
        %v488 = vpop.trf.xlu0
        %489 = vxpose.xlu0.b32.start [1/16] %v233, 128
        %490 = vxpose.xlu0.b32.cont [2/16] %v234, 128
        %491 = vxpose.xlu0.b32.cont [3/16] %v235, 128
        %492 = vxpose.xlu0.b32.cont [4/16] %v236, 128
        %493 = vxpose.xlu0.b32.cont [5/16] %v237, 128
        %494 = vxpose.xlu0.b32.cont [6/16] %v238, 128
        %495 = vxpose.xlu0.b32.cont [7/16] %v239, 128
        %496 = vxpose.xlu0.b32.cont [8/16] %v240, 128
        %497 = vxpose.xlu0.b32.cont [9/16] %v241, 128
        %498 = vxpose.xlu0.b32.cont [10/16] %v242, 128
        %499 = vxpose.xlu0.b32.cont [11/16] %v243, 128
        %500 = vxpose.xlu0.b32.cont [12/16] %v244, 128
        %501 = vxpose.xlu0.b32.cont [13/16] %v245, 128
        %502 = vxpose.xlu0.b32.cont [14/16] %v246, 128
        %503 = vxpose.xlu0.b32.cont [15/16] %v247, 128
        %504 = vxpose.xlu0.b32.end [16/16] %v248, 128
        %v505 = vpop.trf.xlu0
        %v506 = vpop.trf.xlu0
        %v507 = vpop.trf.xlu0
        %v508 = vpop.trf.xlu0
        %v509 = vpop.trf.xlu0
        %v510 = vpop.trf.xlu0
        %v511 = vpop.trf.xlu0
        %v512 = vpop.trf.xlu0
        %v513 = vpop.trf.xlu0
        %v514 = vpop.trf.xlu0
        %v515 = vpop.trf.xlu0
        %v516 = vpop.trf.xlu0
        %v517 = vpop.trf.xlu0
        %v518 = vpop.trf.xlu0
        %v519 = vpop.trf.xlu0
        %v520 = vpop.trf.xlu0
        %521 = vxpose.xlu0.b32.start [1/16] %v249, 128
        %522 = vxpose.xlu0.b32.cont [2/16] %v250, 128
        %523 = vxpose.xlu0.b32.cont [3/16] %v251, 128
        %524 = vxpose.xlu0.b32.cont [4/16] %v252, 128
        %525 = vxpose.xlu0.b32.cont [5/16] %v253, 128
        %526 = vxpose.xlu0.b32.cont [6/16] %v254, 128
        %527 = vxpose.xlu0.b32.cont [7/16] %v255, 128
        %528 = vxpose.xlu0.b32.cont [8/16] %v256, 128
        %529 = vxpose.xlu0.b32.cont [9/16] %v257, 128
        %530 = vxpose.xlu0.b32.cont [10/16] %v258, 128
        %531 = vxpose.xlu0.b32.cont [11/16] %v259, 128
        %532 = vxpose.xlu0.b32.cont [12/16] %v260, 128
        %533 = vxpose.xlu0.b32.cont [13/16] %v261, 128
        %534 = vxpose.xlu0.b32.cont [14/16] %v262, 128
        %535 = vxpose.xlu0.b32.cont [15/16] %v263, 128
        %536 = vxpose.xlu0.b32.end [16/16] %v264, 128
        %v537 = vpop.trf.xlu0
        %v538 = vpop.trf.xlu0
        %v539 = vpop.trf.xlu0
        %v540 = vpop.trf.xlu0
        %v541 = vpop.trf.xlu0
        %v542 = vpop.trf.xlu0
        %v543 = vpop.trf.xlu0
        %v544 = vpop.trf.xlu0
        %v545 = vpop.trf.xlu0
        %v546 = vpop.trf.xlu0
        %v547 = vpop.trf.xlu0
        %v548 = vpop.trf.xlu0
        %v549 = vpop.trf.xlu0
        %v550 = vpop.trf.xlu0
        %v551 = vpop.trf.xlu0
        %v552 = vpop.trf.xlu0
        %553 = vst [vmem:[%s112] sm:$0xff] %v281
        %554 = vst [vmem:[%s112 + $0x8] sm:$0xff] %v313
        %555 = vst [vmem:[%s112 + $0x10] sm:$0xff] %v345
        %556 = vst [vmem:[%s112 + $0x18] sm:$0xff] %v282
        %557 = vst [vmem:[%s112 + $0x20] sm:$0xff] %v314
        %558 = vst [vmem:[%s112 + $0x28] sm:$0xff] %v346
        %559 = vst [vmem:[%s112 + $0x30] sm:$0xff] %v283
        %560 = vst [vmem:[%s112 + $0x38] sm:$0xff] %v315
        %561 = vst [vmem:[%s112 + $0x40] sm:$0xff] %v347
        %562 = vst [vmem:[%s112 + $0x48] sm:$0xff] %v284
        %563 = vst [vmem:[%s112 + $0x50] sm:$0xff] %v316
        %564 = vst [vmem:[%s112 + $0x58] sm:$0xff] %v348
        %565 = vst [vmem:[%s112 + $0x60] sm:$0xff] %v285
        %566 = vst [vmem:[%s112 + $0x68] sm:$0xff] %v317
        %567 = vst [vmem:[%s112 + $0x70] sm:$0xff] %v349
        %568 = vst [vmem:[%s112 + $0x78] sm:$0xff] %v286
        %569 = vst [vmem:[%s112 + $0x80] sm:$0xff] %v318
        %570 = vst [vmem:[%s112 + $0x88] sm:$0xff] %v350
        %571 = vst [vmem:[%s112 + $0x90] sm:$0xff] %v287
        %572 = vst [vmem:[%s112 + $0x98] sm:$0xff] %v319
        %573 = vst [vmem:[%s112 + $0xa0] sm:$0xff] %v351
        %574 = vst [vmem:[%s112 + $0xa8] sm:$0xff] %v288
        %575 = vst [vmem:[%s112 + $0xb0] sm:$0xff] %v320
        %576 = vst [vmem:[%s112 + $0xb8] sm:$0xff] %v352
        %577 = vst [vmem:[%s112 + $0xc0] sm:$0xff] %v377
        %578 = vst [vmem:[%s112 + $0xc8] sm:$0xff] %v409
        %579 = vst [vmem:[%s112 + $0xd0] sm:$0xff] %v441
        %580 = vst [vmem:[%s112 + $0xd8] sm:$0xff] %v378
        %581 = vst [vmem:[%s112 + $0xe0] sm:$0xff] %v410
        %582 = vst [vmem:[%s112 + $0xe8] sm:$0xff] %v442
        %583 = vst [vmem:[%s112 + $0xf0] sm:$0xff] %v379
        %584 = vst [vmem:[%s112 + $0xf8] sm:$0xff] %v411
        %585 = vst [vmem:[%s112 + $0x100] sm:$0xff] %v443
        %586 = vst [vmem:[%s112 + $0x108] sm:$0xff] %v380
        %587 = vst [vmem:[%s112 + $0x110] sm:$0xff] %v412
        %588 = vst [vmem:[%s112 + $0x118] sm:$0xff] %v444
        %589 = vst [vmem:[%s112 + $0x120] sm:$0xff] %v381
        %590 = vst [vmem:[%s112 + $0x128] sm:$0xff] %v413
        %591 = vst [vmem:[%s112 + $0x130] sm:$0xff] %v445
        %592 = vst [vmem:[%s112 + $0x138] sm:$0xff] %v382
        %593 = vst [vmem:[%s112 + $0x140] sm:$0xff] %v414
        %594 = vst [vmem:[%s112 + $0x148] sm:$0xff] %v446
        %595 = vst [vmem:[%s112 + $0x150] sm:$0xff] %v383
        %596 = vst [vmem:[%s112 + $0x158] sm:$0xff] %v415
        %597 = vst [vmem:[%s112 + $0x160] sm:$0xff] %v447
        %598 = vst [vmem:[%s112 + $0x168] sm:$0xff] %v384
        %599 = vst [vmem:[%s112 + $0x170] sm:$0xff] %v416
        %600 = vst [vmem:[%s112 + $0x178] sm:$0xff] %v448
        %601 = vst [vmem:[%s112 + $0x180] sm:$0xff] %v473
        %602 = vst [vmem:[%s112 + $0x188] sm:$0xff] %v505
        %603 = vst [vmem:[%s112 + $0x190] sm:$0xff] %v537
        %604 = vst [vmem:[%s112 + $0x198] sm:$0xff] %v474
        %605 = vst [vmem:[%s112 + $0x1a0] sm:$0xff] %v506
        %606 = vst [vmem:[%s112 + $0x1a8] sm:$0xff] %v538
        %607 = vst [vmem:[%s112 + $0x1b0] sm:$0xff] %v475
        %608 = vst [vmem:[%s112 + $0x1b8] sm:$0xff] %v507
        %609 = vst [vmem:[%s112 + $0x1c0] sm:$0xff] %v539
        %610 = vst [vmem:[%s112 + $0x1c8] sm:$0xff] %v476
        %611 = vst [vmem:[%s112 + $0x1d0] sm:$0xff] %v508
        %612 = vst [vmem:[%s112 + $0x1d8] sm:$0xff] %v540
        %613 = vst [vmem:[%s112 + $0x1e0] sm:$0xff] %v477
        %614 = vst [vmem:[%s112 + $0x1e8] sm:$0xff] %v509
        %615 = vst [vmem:[%s112 + $0x1f0] sm:$0xff] %v541
        %616 = vst [vmem:[%s112 + $0x1f8] sm:$0xff] %v478
        %617 = vst [vmem:[%s112 + $0x200] sm:$0xff] %v510
        %618 = vst [vmem:[%s112 + $0x208] sm:$0xff] %v542
        %619 = vst [vmem:[%s112 + $0x210] sm:$0xff] %v479
        %620 = vst [vmem:[%s112 + $0x218] sm:$0xff] %v511
        %621 = vst [vmem:[%s112 + $0x220] sm:$0xff] %v543
        %622 = vst [vmem:[%s112 + $0x228] sm:$0xff] %v480
        %623 = vst [vmem:[%s112 + $0x230] sm:$0xff] %v512
        %624 = vst [vmem:[%s112 + $0x238] sm:$0xff] %v544
        %s625 = sand.u32 %s49, 1
        %s626 = scalar_lea.sflag [#allocation3], %s625
        %s627 = sand.u32 %s49, 1
        %s628 = smul.addr %s627, 576
        %s629 = scalar_lea.vmem [#allocation2], %s628
        // Predicated region
        $region25: #{tpu_custom_call.1} parent=23 // pred_check
          %p630 = pneg %p59
        $region26: #{tpu_custom_call.1} parent=23 // pred_check_branch
          %632 = sbr.rel (%p630) target = $region28
        $region27: #{tpu_custom_call.1} parent=23 // pred_region
          %s633 = smul.u32 3, %s15
          %635 = vsyncadd %s626, 0
          %s636 = smul.addr %s633, 24
          %s637 = smul.addr %s636, 8
          %s638 = scalar_lea.hbm %s1, %s637
          %s639 = sshll.u32 %s629, 4
          %s640 = int_to_ptr.vmem [resolvable:$true] %s639
          %s641 = sshll.u32 %s638, 4
          %s642 = int_to_ptr.hbm [resolvable:$true] %s641
          %647 = dma.vmem_to_hbm [thread:$0]  %s640, 9216, %s642, %s626, 384, 384, 24
        $region28: #{tpu_custom_call.1} parent=23 // pred_fallthru
          _
      $region24: #{tpu_custom_call.1} parent=5 // pred_fallthru
        _
      %p648 = scmp.le.s32.totalorder 2, %s10
      // Predicated region
      $region29: #{tpu_custom_call.1} parent=5 // pred_check
        %p649 = pneg %p648
      $region30: #{tpu_custom_call.1} parent=5 // pred_check_branch
        %651 = sbr.rel (%p649) target = $region32
      $region31: #{tpu_custom_call.1} parent=5 // pred_region
        %s652 = ssub.s32 %s10, 2
        // Predicated region
        $region33: #{tpu_custom_call.1} parent=31 // pred_check
          %p653 = pneg %p65
        $region34: #{tpu_custom_call.1} parent=31 // pred_check_branch
          %655 = sbr.rel (%p653) target = $region36
        $region35: #{tpu_custom_call.1} parent=31 // pred_region
          %s656 = sand.u32 %s50, 1
          %s657 = scalar_lea.sflag [#allocation3], %s656
          %s658 = sand.u32 %s50, 1
          %s659 = smul.addr %s658, 576
          %s660 = scalar_lea.vmem [#allocation2], %s659
          %662 = dma.done %s657, 9216
        $region36: #{tpu_custom_call.1} parent=31 // pred_fallthru
          _
      $region32: #{tpu_custom_call.1} parent=5 // pred_fallthru
        _
    $region6: #{tpu_custom_call.1} parent=1 // loop_footer
      %s14 = sadd.s32 1, %s10
    $region7: #{tpu_custom_call.1} parent=1 // loop_footer_branch
      %9 = sbr.rel target = $region3
    $region8: #{tpu_custom_call.1} parent=1 // loop_exit
      _
    %663 = vsyncpa [#allocation3], 1
    %s664 = scalar_lea.sflag [#allocation3], 1
    %665 = vsyncpa %s664, 1

</llo_original>
